<compile_context>
chip_gen: v7x
topology: tpu7x:2x2x1
jax: 0.10.0
libtpu: 0.0.40
codegen_flags: <defaults>
</compile_context>

<pallas_src>
import jax
import jax.numpy as jnp
from jax.experimental import pallas as pl
from jax.experimental.pallas import tpu as pltpu


def _mymodel_kernel(x_ref, w_ref, o_ref):
    # One MXU matmul per row tile: (tm, F) @ (F, F_pad), f32 accumulate,
    # lane-dense (128-wide) unmasked store.
    o_ref[...] = jnp.dot(
        x_ref[...], w_ref[...], preferred_element_type=jnp.float32
    ).astype(o_ref.dtype)


def _choose_row_tile(B, tm):
    """Pick the row-tile size for the batch axis."""
    if B > tm:
        # >= 2 grid steps: amortizes per-step overhead and feeds both v7x TCs.
        return tm
    if B >= 1024:
        # Whole batch fits in one tile but is large: split in two so the
        # second v7x TensorCore has work (no effect on v5e/v6e: 1 TC/chip).
        return 8 * pl.cdiv(pl.cdiv(B, 2), 8)
    # Small batch: single tile; block row dim == full array dim is legal.
    return B


def make_mymodel_forward(weight1, weight2, *, tm=4096, pallas_min_batch=1024):
    """Fold/pad the static weights once and return a jitted forward(x)."""
    F = weight1.shape[0]
    assert weight1.shape == (F, F) and weight2.shape == (F, F)
    dtype = weight1.dtype
    itemsize = jnp.dtype(dtype).itemsize
    F_pad = 128 * pl.cdiv(F, 128)

    # Static parameter prep, done exactly once (hoisted out of the call path):
    #   w12  = weight1 @ weight2          (fold: one MXU dot in-kernel, not two)
    #   w_p  = w12 zero-padded on its OUTPUT dim to 128 lanes -> lane-dense out.
    w12 = jnp.dot(weight1, weight2, preferred_element_type=jnp.float32).astype(dtype)
    w_p = jnp.zeros((F, F_pad), dtype).at[:, :F].set(w12)

    def forward(x, *, force_pallas=False):
        B, Fx = x.shape
        assert Fx == F, f"expected {F} features, got {Fx}"

        # Small-batch fast path: one fused XLA dot beats custom-call overhead.
        if (B < pallas_min_batch) and not force_pallas:
            return jnp.dot(x, w12, preferred_element_type=jnp.float32).astype(x.dtype)

        tm_eff = _choose_row_tile(B, tm)
        grid = (pl.cdiv(B, tm_eff),)  # partial last block is masked on store

        # Advisory cost from ACTUAL transferred bytes / logical FLOPs.
        cost = pl.CostEstimate(
            flops=2 * B * F * F_pad,
            transcendentals=0,
            bytes_accessed=(B * F + F * F_pad + B * F_pad) * itemsize,
        )

        # VMEM: double-buffered x (tm*F*4) + y (tm*F_pad*4) + single weight
        # buffer ~ 5 MiB at tm=4096 f32 -> under the 16 MiB v5e default scoped
        # limit; no vmem_limit_bytes override needed at these tile sizes.
        y_p = pl.pallas_call(
            _mymodel_kernel,
            out_shape=jax.ShapeDtypeStruct((B, F_pad), x.dtype),
            grid=grid,
            in_specs=[
                # x: unpadded (tm, F) row tiles; last dim == full array dim.
                pl.BlockSpec((tm_eff, F), lambda i: (i, 0)),
                # fused weight: full block, constant index_map -> resident in
                # VMEM; single buffer (no second pipeline buffer needed).
                pl.BlockSpec((F, F_pad), lambda i: (0, 0),
                             pipeline_mode=pl.Buffered(1)),
            ],
            # output kept lane-dense at 128 lanes -> unmasked vst.
            out_specs=pl.BlockSpec((tm_eff, F_pad), lambda i: (i, 0)),
            compiler_params=pltpu.CompilerParams(
                dimension_semantics=("parallel",)),
            cost_estimate=cost,
        )(x, w_p)

        # Strip the lane padding back to the caller's logical feature width.
        return y_p[:, :F]

    return jax.jit(forward, static_argnames=("force_pallas",))


if __name__ == "__main__":
    key = jax.random.PRNGKey(0)
    kx, kw1, kw2, kx2 = jax.random.split(key, 4)

    # Deterministic "torch.rand"-style (uniform [0, 1)) parameter init.
    weight1 = jax.random.uniform(kw1, (20, 20), dtype=jnp.float32)  # nn.Parameter
    weight2 = jax.random.uniform(kw2, (20, 20), dtype=jnp.float32)  # plain tensor

    forward = make_mymodel_forward(weight1, weight2)

    # Small input consistent with the 20-feature weights: batch=8, features=20.
    x_small = jax.random.uniform(kx, (8, 20), dtype=jnp.float32)

    # 1) Run the Pallas kernel once (forced, since B=8 would hit the fast path).
    y_small = forward(x_small, force_pallas=True)
    jax.block_until_ready(y_small)

    # 2) Small-batch fast path (plain fused dot).
    y_fast = forward(x_small)
    jax.block_until_ready(y_fast)

    # 3) Larger batch exercises the tiled Pallas path (grid > 1, megacore split).
    x_big = jax.random.uniform(kx2, (2048, 20), dtype=jnp.float32)
    y_big = forward(x_big)
    jax.block_until_ready(y_big)

    # Sanity checks against plain-JAX references (fused and chained order).
    ref_small_fused = x_small @ (weight1 @ weight2)
    ref_small_chain = (x_small @ weight1) @ weight2
    ref_big = x_big @ (weight1 @ weight2)

    assert y_small.shape == (8, 20)
    assert y_big.shape == (2048, 20)
    assert jnp.allclose(y_small, ref_small_fused, atol=1e-4, rtol=1e-4)
    assert jnp.allclose(y_small, ref_small_chain, atol=1e-3, rtol=1e-4)
    assert jnp.allclose(y_fast, ref_small_fused, atol=1e-4, rtol=1e-4)
    assert jnp.allclose(y_big, ref_big, atol=1e-3, rtol=1e-4)

    print("KERNEL_OK")
</pallas_src>

<mosaic_0001>
module attributes {stable_mosaic.version = 11 : i64} {
  func.func @_mymodel_kernel(%arg0: i32, %arg1: memref<8x20xf32, #tpu.memory_space<vmem>>, %arg2: memref<20x128xf32, #tpu.memory_space<vmem>>, %arg3: memref<8x128xf32, #tpu.memory_space<vmem>>) attributes {dimension_semantics = [#tpu.dimension_semantics<parallel>], iteration_bounds = array<i64: 1>, scalar_prefetch = 0 : i64, scratch_operands = 0 : i64, tpu.core_type = #tpu.core_type<tc>, window_params = [{transform_indices = @transform_0, window_bounds = array<i64: 8, 20>}, {pipeline_mode = #tpu.pipeline_mode<synchronous>, transform_indices = @transform_1, window_bounds = array<i64: 20, 128>}, {transform_indices = @transform_2, window_bounds = array<i64: 8, 128>}]} {
    %c0 = arith.constant 0 : index
    %c0_0 = arith.constant 0 : index
    %0 = vector.load %arg1[%c0, %c0_0] : memref<8x20xf32, #tpu.memory_space<vmem>>, vector<8x20xf32>
    %c0_1 = arith.constant 0 : index
    %c0_2 = arith.constant 0 : index
    %1 = vector.load %arg2[%c0_1, %c0_2] : memref<20x128xf32, #tpu.memory_space<vmem>>, vector<20x128xf32>
    %cst = arith.constant dense<0.000000e+00> : vector<8x128xf32>
    %2 = tpu.matmul %0, %1, %cst {dimension_numbers = #tpu.dot_dimension_numbers<[1], [0], [0], [1], [0, 0, 1, 1], [], []>} : vector<8x20xf32>, vector<20x128xf32>, vector<8x128xf32> -> vector<8x128xf32>
    %c0_3 = arith.constant 0 : index
    %c0_4 = arith.constant 0 : index
    %3 = vector.load %arg3[%c0_3, %c0_4] : memref<8x128xf32, #tpu.memory_space<vmem>>, vector<8x128xf32>
    tpu.vector_store %arg3[%c0_3, %c0_4], %2 {strides = array<i32>} : memref<8x128xf32, #tpu.memory_space<vmem>>, vector<8x128xf32>,
    return
  }
  func.func @transform_0(%arg0: i32) -> (i32, i32) {
    %c0_i32 = arith.constant 0 : i32
    %c0_i32_0 = arith.constant 0 : i32
    return %arg0, %c0_i32 : i32, i32
  }
  func.func @transform_1(%arg0: i32) -> (i32, i32) {
    %c0_i32 = arith.constant 0 : i32
    %c0_i32_0 = arith.constant 0 : i32
    %c0_i32_1 = arith.constant 0 : i32
    return %c0_i32, %c0_i32_0 : i32, i32
  }
  func.func @transform_2(%arg0: i32) -> (i32, i32) {
    %c0_i32 = arith.constant 0 : i32
    %c0_i32_0 = arith.constant 0 : i32
    return %arg0, %c0_i32 : i32, i32
  }
}

</mosaic_0001>

<llo_original>
// kernel: forward.1
$region0: #{forward.1}
  #allocation0 [shape = 'u32[]', space=smem, size = 0x4, offset = 0x4, fixed_abs, tag = 'smem constant byte address 0x4 - core index']
  #allocation1 [shape = 'u32[144,128]{1,0:T(1,128)}', space=vmem, size = 0x12000, scoped, tag = 'internal scratch']
  %s0 = inlined_call_operand.hbm [shape: f32[8,20], index: 0, kind: input, shape index: {}]
  %s1 = inlined_call_operand.hbm [shape: f32[20,128], index: 1, kind: input, shape index: {}]
  %s2 = inlined_call_operand.hbm [shape: f32[8,128], index: 2, kind: output, shape index: {}]
  %s3 = sld [smem:[#allocation0]]
  $region26: #{forward.1} parent=0
    _
  %s5 = ssub.s32 1, %s3
  %s6 = scalar_select 0, %s5, %s3
  $region1: #{forward.1} parent=0
    #allocation2 [shape = 'u8[4096]{0}', space=vmem, size = 0x1000, scoped, tag = 'input window, operand 0, single buffered']
    #allocation3 [shape = 's32[1]{0}', space=sflag, size = 0x4, scoped, tag = 'scoped memory for forward.1']
    #allocation4 [shape = 's32[1]{0}', space=sflag, size = 0x4, scoped, tag = 'scoped memory for forward.1']
    #allocation5 [shape = 'u8[12288]{0}', space=vmem, size = 0x3000, scoped, tag = 'input window, operand 1, single buffered']
    #allocation6 [shape = 's32[1]{0}', space=sflag, size = 0x4, scoped, tag = 'scoped memory for forward.1']
    #allocation7 [shape = 'u8[4096]{0}', space=vmem, size = 0x1000, scoped, tag = 'output window, operand 0, single buffered']
    %7 = vsyncpa [#allocation3], 0
    %8 = vsyncpa [#allocation6], 0
    %9 = vsyncpa [#allocation4], 0
    // Predicated region
    $region2: #{forward.1} parent=1 // pred_check
      _
    $region3: #{forward.1} parent=1 // pred_check_branch
      %11 = sbr.rel (0) target = $region5
    $region4: #{forward.1} parent=1 // pred_region
      %s13 = ssub.s32 128, 128
      %14 = vsyncadd [#allocation3], %s13
      %s16 = sshll.u32 [#allocation2], 4
      %s17 = int_to_ptr.vmem [resolvable:$true] %s16
      %19 = dma.hbm_to_vmem [thread:$0]  %s0, 128, %s17, [#allocation3]
    $region5: #{forward.1} parent=1 // pred_fallthru
      _
    // Predicated region
    $region6: #{forward.1} parent=1 // pred_check
      _
    $region7: #{forward.1} parent=1 // pred_check_branch
      %21 = sbr.rel (0) target = $region9
    $region8: #{forward.1} parent=1 // pred_region
      %s23 = ssub.s32 384, 384
      %24 = vsyncadd [#allocation6], %s23
      %s25 = sshll.u32 [#allocation5], 4
      %s26 = int_to_ptr.vmem [resolvable:$true] %s25
      %31 = dma.hbm_to_vmem [thread:$0]  %s1, 384, %s26, [#allocation6], 128, 128, 8
    $region9: #{forward.1} parent=1 // pred_fallthru
      _
    // Predicated region
    $region10: #{forward.1} parent=1 // pred_check
      _
    $region11: #{forward.1} parent=1 // pred_check_branch
      %33 = sbr.rel (0) target = $region13
    $region12: #{forward.1} parent=1 // pred_region
      %34 = dma.done [#allocation3], 128
    $region13: #{forward.1} parent=1 // pred_fallthru
      _
    // Predicated region
    $region14: #{forward.1} parent=1 // pred_check
      _
    $region15: #{forward.1} parent=1 // pred_check_branch
      %36 = sbr.rel (0) target = $region17
    $region16: #{forward.1} parent=1 // pred_region
      %37 = dma.done [#allocation6], 384
    $region17: #{forward.1} parent=1 // pred_fallthru
      _
    %v38 = vld [vmem:[#allocation2] sm:$0xff]
    %v39 = vld [vmem:[#allocation5] sm:$0xff]
    %v40 = vld [vmem:[#allocation5 + $0x8] sm:$0xff]
    %v41 = vld [vmem:[#allocation5 + $0x10] sm:$0xf]
    %vm42 = vcmask 162816
    %v44 = vsel %vm42, %v38, 0
    %vm46 = vcmask 1043456
    %v48 = vsel %vm46, %v41, 0
    %50 = vmatprep.subr.mxu0 0.0
    %51 = vmatpush1.msra.mxu0 %v39
    %52 = vmatprep.subr.mxu0 0.0
    %53 = vmatpush1.msra.mxu0 %v40
    %54 = vmatprep.subr.mxu0 0.0
    %55 = vmatpush1.msra.mxu0 %v48
    %56 = vmatprep.subr.mxu0 0.0
    %57 = vmatpush1.msra.mxu0 0.0
    %58 = vmatprep.subr.mxu0 0.0
    %59 = vmatpush1.msra.mxu0 0.0
    %60 = vmatprep.subr.mxu0 0.0
    %61 = vmatpush1.msra.mxu0 0.0
    %62 = vmatprep.subr.mxu0 0.0
    %63 = vmatpush1.msra.mxu0 0.0
    %64 = vmatprep.subr.mxu0 0.0
    %65 = vmatpush1.msra.mxu0 0.0
    %66 = vmatprep.subr.mxu0 0.0
    %67 = vmatpush1.msra.mxu0 0.0
    %68 = vmatprep.subr.mxu0 0.0
    %69 = vmatpush1.msra.mxu0 0.0
    %70 = vmatprep.subr.mxu0 0.0
    %71 = vmatpush1.msra.mxu0 0.0
    %72 = vmatprep.subr.mxu0 0.0
    %73 = vmatpush1.msra.mxu0 0.0
    %74 = vmatprep.subr.mxu0 0.0
    %75 = vmatpush1.msra.mxu0 0.0
    %76 = vmatprep.subr.mxu0 0.0
    %77 = vmatpush1.msra.mxu0 0.0
    %78 = vmatprep.subr.mxu0 0.0
    %79 = vmatpush1.msra.mxu0 0.0
    %80 = vmatprep.subr.mxu0 0.0
    %81 = vmatpush1.msra.mxu0 0.0
    %82 = vmatprep.subr.mxu0 0.0
    %83 = vmatpush1.msra.mxu0 0.0
    %84 = vmatprep.subr.mxu0 0.0
    %85 = vmatpush1.msra.mxu0 0.0
    %86 = vmatprep.subr.mxu0 0.0
    %87 = vmatpush1.msra.mxu0 0.0
    %88 = vmatprep.subr.mxu0 0.0
    %89 = vmatpush1.msra.mxu0 0.0
    %90 = vmatprep.subr.mxu0 0.0
    %91 = vmatpush1.msra.mxu0 0.0
    %92 = vmatprep.subr.mxu0 0.0
    %93 = vmatpush1.msra.mxu0 0.0
    %94 = vmatprep.subr.mxu0 0.0
    %95 = vmatpush1.msra.mxu0 0.0
    %96 = vmatprep.subr.mxu0 0.0
    %97 = vmatpush1.msra.mxu0 0.0
    %98 = vmatprep.subr.mxu0 0.0
    %99 = vmatpush1.msra.mxu0 0.0
    %100 = vmatprep.subr.mxu0 0.0
    %101 = vmatpush1.msra.mxu0 0.0
    %102 = vmatprep.subr.mxu0 0.0
    %103 = vmatpush1.msra.mxu0 0.0
    %104 = vmatprep.subr.mxu0 0.0
    %105 = vmatpush1.msra.mxu0 0.0
    %106 = vmatprep.subr.mxu0 0.0
    %107 = vmatpush1.msra.mxu0 0.0
    %108 = vmatprep.subr.mxu0 0.0
    %109 = vmatpush1.msra.mxu0 0.0
    %110 = vmatprep.subr.mxu0 0.0
    %111 = vmatpush1.msra.mxu0 0.0
    %112 = vmatprep.subr.mxu0 0.0
    %113 = vmatpush1.msra.mxu0 0.0
    %114 = vmatprep.mubr.f32.mxu0 0.0
    %115 = vmatmul.mubr.f32.gmra.mrb[0].mxu0 %v44
    %v116 = vpop.f32.mrb[0].mxu0
    %v117 = vadd.f32 0.0, %v116
    %v118 = vpop.f32.mrb[0].mxu0
    %119 = vdwg.mxu0
    %120 = vst [vmem:[#allocation7] sm:$0xff] %v117
    // Predicated region
    $region18: #{forward.1} parent=1 // pred_check
      _
    $region19: #{forward.1} parent=1 // pred_check_branch
      %122 = sbr.rel (0) target = $region21
    $region20: #{forward.1} parent=1 // pred_region
      %s124 = ssub.s32 128, 128
      %125 = vsyncadd [#allocation4], %s124
      %s127 = sshll.u32 [#allocation7], 4
      %s128 = int_to_ptr.vmem [resolvable:$true] %s127
      %130 = dma.vmem_to_hbm [thread:$0]  %s128, 128, %s2, [#allocation4]
    $region21: #{forward.1} parent=1 // pred_fallthru
      _
    // Predicated region
    $region22: #{forward.1} parent=1 // pred_check
      _
    $region23: #{forward.1} parent=1 // pred_check_branch
      %132 = sbr.rel (0) target = $region25
    $region24: #{forward.1} parent=1 // pred_region
      %133 = dma.done [#allocation4], 128
    $region25: #{forward.1} parent=1 // pred_fallthru
      _
    %134 = vsyncpa [#allocation3], 1
    %135 = vsyncpa [#allocation6], 1
    %136 = vsyncpa [#allocation4], 1

</llo_original>
